<compile_context>
chip_gen: v5e
topology: v5e:2x2
jax: 0.10.0
libtpu: 0.0.40
codegen_flags: <defaults>
</compile_context>

<pallas_src>
import functools

import jax
import jax.numpy as jnp
from jax.experimental import pallas as pl
from jax.experimental.pallas import tpu as pltpu

_LANES = 128
_MIB = 1024 * 1024


def _device_kind() -> str:
    try:
        return jax.devices()[0].device_kind.lower()
    except Exception:  # defensive fallback (interpret / unknown backend)
        return ""


def _tune_for_device():
    """Returns (block_bytes, vmem_limit_bytes_or_None, num_tensorcores)."""
    kind = _device_kind()
    if "v7" in kind:
        # 64 MiB physical VMEM, ~3.2 TB/s HBM: bigger blocks amortize the
        # per-grid-step overhead; 4 x 6 MiB double-buffered footprint stays
        # well inside an explicit 40 MiB scoped limit.
        return 6 * _MIB, 40 * _MIB, 2
    if "v6" in kind:
        # 32 MiB default scoped VMEM: 4 x 4 MiB = 16 MiB footprint.
        return 4 * _MIB, 32 * _MIB, 1
    # v5e (16 MiB default scoped VMEM) / unknown: 4 x 2 MiB = 8 MiB footprint.
    return 2 * _MIB, None, 1


def _compute_dtype_for(dtype):
    # bf16 VPU/EUP exist on v6e/v7x -> compute natively (drops 2 casts/elem
    # and halves vreg pressure). v5e has no bf16 VPU/EUP -> upcast to f32.
    if jnp.dtype(dtype) == jnp.dtype(jnp.bfloat16):
        kind = _device_kind()
        if ("v6" in kind) or ("v7" in kind):
            return jnp.bfloat16
    return jnp.float32


def _swish_kernel(x_ref, o_ref, *, compute_dtype):
    cdt = jnp.dtype(compute_dtype)
    x = x_ref[...].astype(compute_dtype)
    # sigmoid(x) = 1 / (1 + exp(-x)). Clamp the exponent so exp(-x) never
    # overflows for very negative x (there swish underflows to ~0 anyway, so
    # the clamp is invisible at output precision). exp and the reciprocal both
    # live on the EUP slot, so the VPU only carries a handful of cheap ops and
    # the kernel stays memory-bound even at v7x HBM rates.
    clamp = 87.0 if cdt == jnp.dtype(jnp.float32) else 80.0
    t = jnp.minimum(-x, jnp.asarray(clamp, dtype=compute_dtype))
    e = jnp.exp(t)                                   # EUP
    d = jnp.asarray(1.0, dtype=compute_dtype) + e
    if cdt == jnp.dtype(jnp.float32):
        r = pl.reciprocal(d, approx=True)            # EUP, ~12-bit approx
        r = r * (2.0 - d * r)                        # 1 Newton step -> ~f32 accuracy
    else:
        # bf16: the ~12-bit approx already exceeds bf16 precision; keep the
        # reciprocal itself on the always-supported f32 path, rest native.
        r = pl.reciprocal(d.astype(jnp.float32), approx=True).astype(compute_dtype)
    o_ref[...] = (x * r).astype(o_ref.dtype)


def _swish_flat(x_flat, *, donate=False):
    """Swish over a flat, 128-aligned buffer via the Pallas kernel."""
    n = x_flat.shape[0]
    dtype = x_flat.dtype
    itemsize = jnp.dtype(dtype).itemsize

    # Widest lane-dense last dim that divides n.
    width = _LANES
    for w in (1024, 512, 256):
        if n % w == 0:
            width = w
            break
    rows = n // width
    x2d = x_flat.reshape(rows, width)

    block_bytes, vmem_limit, num_tc = _tune_for_device()
    tile_rows = max(8, (block_bytes // (width * itemsize)) // 8 * 8)
    tile_rows = min(tile_rows, rows)
    # Keep >= num_tc grid steps (when there are enough rows) so both v7x
    # TensorCores get work under dimension_semantics=("parallel",).
    if num_tc > 1 and rows >= 8 * num_tc and pl.cdiv(rows, tile_rows) < num_tc:
        tile_rows = max(8, ((pl.cdiv(rows, num_tc) + 7) // 8) * 8)
    grid = (pl.cdiv(rows, tile_rows),)

    kernel = functools.partial(
        _swish_kernel, compute_dtype=_compute_dtype_for(dtype))

    out = pl.pallas_call(
        kernel,
        out_shape=jax.ShapeDtypeStruct((rows, width), dtype),
        grid_spec=pltpu.PrefetchScalarGridSpec(
            num_scalar_prefetch=0,
            grid=grid,
            in_specs=[pl.BlockSpec((tile_rows, width), lambda i: (i, 0))],
            out_specs=pl.BlockSpec((tile_rows, width), lambda i: (i, 0)),
        ),
        compiler_params=pltpu.CompilerParams(
            dimension_semantics=("parallel",),
            vmem_limit_bytes=vmem_limit,
        ),
        # Advisory: tell XLA's scheduler this is a mem-bound streaming op.
        cost_estimate=pl.CostEstimate(
            flops=8 * n, transcendentals=2 * n, bytes_accessed=2 * n * itemsize),
        # Opt-in aliasing: halves peak HBM footprint when the caller donates x.
        input_output_aliases=({0: 0} if donate else {}),
    )(x2d)
    return out.reshape(n)


def swish(x, *, donate=False):
    """Elementwise swish (x * sigmoid(x)). Any shape; same shape/dtype out."""
    orig_shape = x.shape
    orig_dtype = x.dtype
    n = x.size
    if n == 0:
        return x

    x_flat = jnp.ravel(x)
    n_main = (n // _LANES) * _LANES

    if n_main == n:
        # Fast path: lane-aligned element count (common NCHW case) -> single
        # kernel pass, no pad / de-pad HBM traffic.
        return _swish_flat(x_flat, donate=donate).reshape(orig_shape)

    if n_main == 0:
        # Fewer than 128 elements: a kernel launch + pad pass costs more than
        # it saves; compute directly in JAX.
        xf = x_flat.astype(jnp.float32)
        return (xf * jax.nn.sigmoid(xf)).astype(orig_dtype).reshape(orig_shape)

    # Unaligned: kernel on the lane-aligned prefix, <128-element tail in plain
    # JAX, stitched back together (avoids the pad + full de-pad slice passes).
    head_out = _swish_flat(x_flat[:n_main])
    tail = x_flat[n_main:].astype(jnp.float32)
    tail_out = (tail * jax.nn.sigmoid(tail)).astype(orig_dtype)
    return jnp.concatenate([head_out, tail_out]).reshape(orig_shape)


if __name__ == "__main__":
    key = jax.random.PRNGKey(0)
    k1, k2, k3 = jax.random.split(key, 3)

    # NCHW input matching the SE_FBCNet usage: batch=2, channels=4, 16x16
    # (2048 elements -> lane-aligned fast path).
    x = jax.random.normal(k1, (2, 4, 16, 16), dtype=jnp.float32)
    y = jax.block_until_ready(swish(x))
    y_ref = x * jax.nn.sigmoid(x)
    assert y.shape == x.shape and y.dtype == x.dtype
    assert jnp.allclose(y, y_ref, atol=2e-5, rtol=2e-5)

    # Non-128-aligned shape exercises the prefix-kernel + jnp-tail path.
    x2 = jax.random.normal(k2, (3, 5, 7, 11), dtype=jnp.float32)
    y2 = jax.block_until_ready(swish(x2))
    y2_ref = x2 * jax.nn.sigmoid(x2)
    assert y2.shape == x2.shape and y2.dtype == x2.dtype
    assert jnp.allclose(y2, y2_ref, atol=2e-5, rtol=2e-5)

    # bf16 input (native-dtype compute on v6e/v7x, f32 upcast elsewhere).
    x3 = jax.random.normal(k3, (2, 4, 16, 16), dtype=jnp.bfloat16)
    y3 = jax.block_until_ready(swish(x3))
    x3f = x3.astype(jnp.float32)
    y3_ref = x3f * jax.nn.sigmoid(x3f)
    assert y3.shape == x3.shape and y3.dtype == x3.dtype
    assert jnp.allclose(y3.astype(jnp.float32), y3_ref, atol=1.2e-1, rtol=5e-2)

    print("KERNEL_OK")
</pallas_src>

<mosaic_0001>
module attributes {stable_mosaic.version = 11 : i64} {
  func.func @_swish_kernel(%arg0: i32, %arg1: memref<2x1024xf32, #tpu.memory_space<vmem>>, %arg2: memref<2x1024xf32, #tpu.memory_space<vmem>>) attributes {dimension_semantics = [#tpu.dimension_semantics<parallel>], iteration_bounds = array<i64: 1>, scalar_prefetch = 0 : i64, scratch_operands = 0 : i64, tpu.core_type = #tpu.core_type<tc>, window_params = [{transform_indices = @transform_0, window_bounds = array<i64: 2, 1024>}, {transform_indices = @transform_1, window_bounds = array<i64: 2, 1024>}]} {
    %c0 = arith.constant 0 : index
    %c0_0 = arith.constant 0 : index
    %0 = vector.load %arg1[%c0, %c0_0] : memref<2x1024xf32, #tpu.memory_space<vmem>>, vector<2x1024xf32>
    %cst = arith.constant 0.000000e+00 : f32
    %1 = vector.broadcast %cst : f32 to vector<2x1024xf32>
    %2 = arith.subf %1, %0 : vector<2x1024xf32>
    %cst_1 = arith.constant 8.700000e+01 : f32
    %3 = vector.broadcast %cst_1 : f32 to vector<2x1024xf32>
    %4 = arith.minimumf %2, %3 : vector<2x1024xf32>
    %5 = math.exp %4 : vector<2x1024xf32>
    %cst_2 = arith.constant 1.000000e+00 : f32
    %6 = vector.broadcast %cst_2 : f32 to vector<2x1024xf32>
    %7 = arith.addf %6, %5 : vector<2x1024xf32>
    %8 = tpu.reciprocal %7 {approx = true} : vector<2x1024xf32> -> vector<2x1024xf32>
    %9 = arith.mulf %7, %8 : vector<2x1024xf32>
    %cst_3 = arith.constant 2.000000e+00 : f32
    %10 = vector.broadcast %cst_3 : f32 to vector<2x1024xf32>
    %11 = arith.subf %10, %9 : vector<2x1024xf32>
    %12 = arith.mulf %8, %11 : vector<2x1024xf32>
    %13 = arith.mulf %0, %12 : vector<2x1024xf32>
    %c0_4 = arith.constant 0 : index
    %c0_5 = arith.constant 0 : index
    %14 = vector.load %arg2[%c0_4, %c0_5] : memref<2x1024xf32, #tpu.memory_space<vmem>>, vector<2x1024xf32>
    tpu.vector_store %arg2[%c0_4, %c0_5], %13 {strides = array<i32>} : memref<2x1024xf32, #tpu.memory_space<vmem>>, vector<2x1024xf32>,
    return
  }
  func.func @transform_0(%arg0: i32) -> (i32, i32) {
    %c0_i32 = arith.constant 0 : i32
    %c0_i32_0 = arith.constant 0 : i32
    return %arg0, %c0_i32 : i32, i32
  }
  func.func @transform_1(%arg0: i32) -> (i32, i32) {
    %c0_i32 = arith.constant 0 : i32
    %c0_i32_0 = arith.constant 0 : i32
    return %arg0, %c0_i32 : i32, i32
  }
}

</mosaic_0001>

<llo_original>
// kernel: tpu_custom_call.1
$region0: #{tpu_custom_call.1}
  #allocation0 [shape = 'u32[]', space=smem, size = 0x4, offset = 0x4, fixed_abs, tag = 'smem constant byte address 0x4 - core index']
  #allocation1 [shape = 'u32[72,128]{1,0:T(1,128)}', space=vmem, size = 0x9000, scoped, tag = 'internal scratch']
  %s0 = inlined_call_operand.hbm [shape: f32[2,1024], index: 0, kind: input, shape index: {}]
  %s1 = inlined_call_operand.hbm [shape: f32[2,1024], index: 1, kind: output, shape index: {}]
  %s2 = sld [smem:[#allocation0]]
  $region18: #{tpu_custom_call.1} parent=0
    _
  %s4 = ssub.s32 1, %s2
  %s5 = scalar_select 0, %s4, %s2
  $region1: #{tpu_custom_call.1} parent=0
    #allocation2 [shape = 'u8[8192]{0}', space=vmem, size = 0x2000, scoped, tag = 'input window, operand 0, single buffered']
    #allocation3 [shape = 's32[1]{0}', space=sflag, size = 0x4, scoped, tag = 'scoped memory for tpu_custom_call.1']
    #allocation4 [shape = 's32[1]{0}', space=sflag, size = 0x4, scoped, tag = 'scoped memory for tpu_custom_call.1']
    #allocation5 [shape = 'u8[8192]{0}', space=vmem, size = 0x2000, scoped, tag = 'output window, operand 0, single buffered']
    %6 = vsyncpa [#allocation3], 0
    %7 = vsyncpa [#allocation4], 0
    // Predicated region
    $region2: #{tpu_custom_call.1} parent=1 // pred_check
      _
    $region3: #{tpu_custom_call.1} parent=1 // pred_check_branch
      %9 = sbr.rel (0) target = $region5
    $region4: #{tpu_custom_call.1} parent=1 // pred_region
      %11 = vsyncadd [#allocation3], 0
      %s13 = sshll.u32 %s0, 4
      %s14 = int_to_ptr.hbm [resolvable:$true] %s13
      %s15 = sshll.u32 [#allocation2], 4
      %s16 = int_to_ptr.vmem [resolvable:$true] %s15
      %18 = dma.hbm_to_vmem [thread:$0]  %s14, 256, %s16, [#allocation3]
    $region5: #{tpu_custom_call.1} parent=1 // pred_fallthru
      _
    // Predicated region
    $region6: #{tpu_custom_call.1} parent=1 // pred_check
      _
    $region7: #{tpu_custom_call.1} parent=1 // pred_check_branch
      %20 = sbr.rel (0) target = $region9
    $region8: #{tpu_custom_call.1} parent=1 // pred_region
      %22 = dma.done [#allocation3], 256
    $region9: #{tpu_custom_call.1} parent=1 // pred_fallthru
      _
    %v23 = vld [vmem:[#allocation2] sm:$0xff]
    %v24 = vld [vmem:[#allocation2 + $0x8] sm:$0xff]
    %v25 = vsub.f32 0.0, %v23
    %v26 = vsub.f32 0.0, %v24
    %v27 = vmin.f32 %v25, 87.0
    %v28 = vmin.f32 %v26, 87.0
    %v29 = vmul.f32 %v27, 1.442695
    %v30 = vpow.pop %v29
    %v31 = vmul.f32 %v28, 1.442695
    %v32 = vpow.pop %v31
    %v33 = vadd.f32 %v30, 1.0
    %v34 = vadd.f32 %v32, 1.0
    %v35 = vrcp.pop %v33
    %v36 = vrcp.pop %v34
    %v37 = vmul.f32 %v33, %v35
    %v38 = vmul.f32 %v34, %v36
    %v39 = vsub.f32 2.0, %v37
    %v40 = vsub.f32 2.0, %v38
    %v41 = vmul.f32 %v35, %v39
    %v42 = vmul.f32 %v36, %v40
    %v43 = vmul.f32 %v23, %v41
    %v44 = vmul.f32 %v24, %v42
    %45 = vst [vmem:[#allocation5] sm:$0xff] %v43
    %46 = vst [vmem:[#allocation5 + $0x8] sm:$0xff] %v44
    // Predicated region
    $region10: #{tpu_custom_call.1} parent=1 // pred_check
      _
    $region11: #{tpu_custom_call.1} parent=1 // pred_check_branch
      %48 = sbr.rel (0) target = $region13
    $region12: #{tpu_custom_call.1} parent=1 // pred_region
      %50 = vsyncadd [#allocation4], 0
      %s52 = sshll.u32 [#allocation5], 4
      %s53 = int_to_ptr.vmem [resolvable:$true] %s52
      %s54 = sshll.u32 %s1, 4
      %s55 = int_to_ptr.hbm [resolvable:$true] %s54
      %57 = dma.vmem_to_hbm [thread:$0]  %s53, 256, %s55, [#allocation4]
    $region13: #{tpu_custom_call.1} parent=1 // pred_fallthru
      _
    // Predicated region
    $region14: #{tpu_custom_call.1} parent=1 // pred_check
      _
    $region15: #{tpu_custom_call.1} parent=1 // pred_check_branch
      %59 = sbr.rel (0) target = $region17
    $region16: #{tpu_custom_call.1} parent=1 // pred_region
      %61 = dma.done [#allocation4], 256
    $region17: #{tpu_custom_call.1} parent=1 // pred_fallthru
      _
    %62 = vsyncpa [#allocation3], 1
    %63 = vsyncpa [#allocation4], 1

</llo_original>
